<compile_context>
chip_gen: v6e
topology: v6e:2x2x1
jax: 0.10.0
libtpu: 0.0.40
codegen_flags: <defaults>
</compile_context>

<pallas_src>
import jax
import jax.numpy as jnp
from jax import lax
from jax.experimental import pallas as pl
from jax.experimental.pallas import tpu as pltpu


KPATCH = 16  # conv1 patch width (11 real taps, zero-padded to 16 for a tidy MXU K dim)


# ---------------------------------------------------------------------------
# Fused Pallas kernel
# ---------------------------------------------------------------------------

def _make_fused_kernel(TB, L3):
    """Fused forward for one batch tile of TB examples; L3 = input_size // 8.

    Activation row layout inside the kernel: r = p*TB + b  (position-group major, batch
    minor); lanes carry channels.  Every neighbour access is a sublane-aligned TB-row shift
    and the final flatten is a static lane concatenation.
    """
    N = TB * L3

    def kernel(x11_ref, w1_ref, b1_ref, w2_ref, b2_ref,
               wf1_ref, bf1_ref, wf2_ref, bf2_ref, o_ref):
        f32 = jnp.float32

        # ---- conv1 (k=5, s=2, p=2) + ReLU + maxpool(2,2) on the MXU -------------------
        # x11_ref row r = p*TB + b holds x[b, 8p-2 : 8p+9] (zero padded), 16 lanes.
        # W1c column layout: [pos 4p | 4p+2 | 4p+1 | 4p+3] x 32 channels, so the two lane
        # halves of Y1 are exactly the two maxpool candidates of pool1 positions 2p / 2p+1.
        Y1 = jnp.dot(x11_ref[...], w1_ref[...], preferred_element_type=f32)      # (N, 128)
        Z1 = jnp.maximum(jnp.maximum(Y1[:, 0:64], Y1[:, 64:128]) + b1_ref[...], 0.0)  # (N, 64)
        # Z1[p*TB + b, k*32 + c] = pool1(relu(conv1))[b, c, 2p + k]

        # ---- conv2 (k=5, s=1, p=2) + ReLU + maxpool(2,2): one lane-dense MXU matmul ----
        zrow = jnp.zeros((TB, 64), f32)
        Z1_prev = jnp.concatenate([zrow, Z1[:-TB, :]], axis=0)   # pool1 positions 2p-2, 2p-1
        Z1_next = jnp.concatenate([Z1[TB:, :], zrow], axis=0)    # pool1 positions 2p+2, 2p+3
        P = jnp.concatenate([Z1_prev, Z1, Z1_next], axis=1)      # (N, 192): positions 2p-2..2p+3
        # W2c lanes 0:64 = conv2 output at q=2p, lanes 64:128 = q=2p+1.
        Y2 = jnp.dot(P, w2_ref[...], preferred_element_type=f32)                 # (N, 128)
        Z2 = jnp.maximum(jnp.maximum(Y2[:, 0:64], Y2[:, 64:128]) + b2_ref[...], 0.0)  # (N, 64)
        # Z2[p*TB + b, o] = pool2(relu(conv2))[b, o, p]

        # ---- flatten (PyTorch order folded into fc1 weight) + fc1 + ReLU + fc2 --------
        # F[b, p*64 + o] = Z2[p*TB + b, o]; fc1 weight rows were permuted to match.
        F = jnp.concatenate([Z2[p * TB:(p + 1) * TB, :] for p in range(L3)], axis=1)  # (TB, 64*L3)
        h = jnp.maximum(
            jnp.dot(F, wf1_ref[...], preferred_element_type=f32) + bf1_ref[...], 0.0)
        # nn.Dropout(0.5): identity in eval/inference mode.
        o_ref[...] = jnp.dot(h, wf2_ref[...], preferred_element_type=f32) + bf2_ref[...]

    return kernel


# ---------------------------------------------------------------------------
# Batch-tile selection (generation-aware VMEM budgeting)
# ---------------------------------------------------------------------------

def _round_up(a, m):
    return ((a + m - 1) // m) * m


def _choose_batch_tile(B, L3, requested):
    b8 = _round_up(B, 8)
    if requested is not None:
        return max(8, min(_round_up(requested, 8), b8))
    # ~4 KB of live f32 staging per (batch, position-group) pair at peak (includes the
    # lane-padded 16-wide patch block); keep staging under ~20 MiB so the whole kernel
    # (staging + double-buffered blocks + 2x resident weights) fits v7x's 64 MiB VMEM.
    cap = max(8, ((20 << 20) // (4096 * L3)) // 8 * 8)
    tb = min(256, cap, b8)
    # v7x has 2 TensorCores: prefer >=2 grid steps when it introduces no padding rows.
    if tb == b8 and tb >= 16 and tb % 16 == 0:
        tb //= 2
    return tb


# ---------------------------------------------------------------------------
# Forward pass wrapper
# ---------------------------------------------------------------------------

def fingerprint_forward(x, params, *, batch_tile=None):
    """x: (B, L) float32. params in PyTorch layouts (see init_params)."""
    w1, b1, w2, b2, wf1, bf1, wf2, bf2 = params
    B, L = x.shape
    assert L % 8 == 0, "input_size must be divisible by 8"
    L3 = L // 8
    hidden = wf1.shape[0]
    n_cls = wf2.shape[0]

    TB = _choose_batch_tile(B, L3, batch_tile)
    assert TB % 8 == 0, "batch tile must be a multiple of 8"
    BP = _round_up(B, TB)
    nt = BP // TB
    N = TB * L3
    x_bp = jnp.pad(x, ((0, BP - B), (0, 0))) if BP != B else x

    # ---- layout plumbing for x (wrapper-side XLA, O(1) ops, no compute hoisted) ----
    # Row (i, p, b_local) of x11 holds x[i*TB+b_local, 8p-2 : 8p+9] zero-padded to 16 lanes.
    xpad = jnp.pad(x_bp, ((0, 0), (2, 6)))                              # (BP, L+8)
    lo = xpad[:, :8 * L3].reshape(BP, L3, 8)                            # offsets -2..5
    hi = xpad[:, 8:8 + 8 * L3].reshape(BP, L3, 8)[:, :, :3]             # offsets 6..8
    x11 = jnp.concatenate([lo, hi, jnp.zeros((BP, L3, KPATCH - 11), jnp.float32)], axis=-1)
    x11 = (x11.reshape(nt, TB, L3, KPATCH)
               .transpose(0, 2, 1, 3)
               .reshape(nt * N, KPATCH))                                 # rows: i*N + p*TB + b

    # ---- one-time weight packing (PyTorch layouts -> MXU-friendly layouts) ----
    # conv1: W1c[2m+t, block(m)*32 + c] = w1[c, 0, t]; column blocks ordered [m0|m2|m1|m3].
    w1sq = w1[:, 0, :]                                                   # (32, 5) [c, t]
    w4 = jnp.zeros((KPATCH, 4, 32), jnp.float32)
    for m in range(4):
        for t in range(5):
            w4 = w4.at[2 * m + t, m, :].set(w1sq[:, t])
    w1c = w4[:, (0, 2, 1, 3), :].reshape(KPATCH, 128)
    b1_2 = jnp.concatenate([b1, b1])[None, :]                            # (1, 64)

    # conv2: P lane-group g holds pool1 position 2p-2+g; even output uses tap t at g=t,
    # odd output uses tap t at g=t+1.
    w2t = jnp.transpose(w2, (2, 1, 0))                                   # (5, 32, 64) [t, c, o]
    w6 = jnp.zeros((6, 32, 2, 64), jnp.float32)
    for t in range(5):
        w6 = w6.at[t, :, 0, :].set(w2t[t])
        w6 = w6.at[t + 1, :, 1, :].set(w2t[t])
    w2c = w6.reshape(192, 128)
    b2r = b2[None, :]                                                    # (1, 64)

    # fc1: fold PyTorch flatten order (c*L3 + p) into the weight; kernel features are p*64 + c.
    wf1p = wf1.T.reshape(64, L3, hidden).transpose(1, 0, 2).reshape(L3 * 64, hidden)
    bf1r = bf1[None, :]
    # fc2: lane-dense output (pad num_classes to a multiple of 128 inside the params).
    ncp = max(128, _round_up(n_cls, 128))
    wf2p = jnp.zeros((hidden, ncp), jnp.float32).at[:, :n_cls].set(wf2.T)
    bf2p = jnp.zeros((1, ncp), jnp.float32).at[:, :n_cls].set(bf2)

    # ---- cost / VMEM accounting ----
    weight_bytes = 4 * (KPATCH * 128 + 64 + 192 * 128 + 64
                        + L3 * 64 * hidden + hidden + hidden * ncp + ncp)
    block_bytes = 4 * (N * 128 + TB * ncp)            # x11 block is lane-padded to 128 in VMEM
    staging_bytes = 4096 * N
    vmem_limit = int(min(64 << 20,
                         max(32 << 20,
                             2 * weight_bytes + 2 * block_bytes + staging_bytes + (4 << 20))))
    flops = (2 * BP * L3 * (KPATCH * 128 + 192 * 128)
             + 2 * BP * (L3 * 64 * hidden + hidden * ncp))
    bytes_accessed = 4 * (BP * L3 * KPATCH + BP * ncp) + weight_bytes

    kernel = _make_fused_kernel(TB, L3)

    def resident(shape):            # full-array block, constant index -> stays VMEM-resident
        return pl.BlockSpec(shape, lambda i: (0, 0))

    out = pl.pallas_call(
        kernel,
        out_shape=jax.ShapeDtypeStruct((BP, ncp), jnp.float32),
        grid=(nt,),
        in_specs=[
            pl.BlockSpec((N, KPATCH), lambda i: (i, 0)),            # conv1 patches, batch-tiled
            resident((KPATCH, 128)), resident((1, 64)),             # conv1 weight / bias
            resident((192, 128)), resident((1, 64)),                # conv2 weight / bias
            resident((L3 * 64, hidden)), resident((1, hidden)),     # fc1 weight / bias (permuted)
            resident((hidden, ncp)), resident((1, ncp)),            # fc2 weight / bias (lane-padded)
        ],
        out_specs=pl.BlockSpec((TB, ncp), lambda i: (i, 0)),
        compiler_params=pltpu.CompilerParams(
            dimension_semantics=("parallel",),                      # split batch tiles over TCs
            vmem_limit_bytes=vmem_limit),
        cost_estimate=pl.CostEstimate(flops=int(flops), transcendentals=0,
                                      bytes_accessed=int(bytes_accessed)),
    )(x11, w1c, b1_2, w2c, b2r, wf1p, bf1r, wf2p, bf2p)

    return out[:B, :n_cls]


# ---------------------------------------------------------------------------
# Pure-JAX reference (mirrors the PyTorch forward exactly) for validation
# ---------------------------------------------------------------------------

def reference_forward(x, params):
    w1, b1, w2, b2, wf1, bf1, wf2, bf2 = params
    y = x[:, None, :]                                              # (B, 1, L)  NCL
    y = lax.conv_general_dilated(y, w1, window_strides=(2,), padding=[(2, 2)],
                                 dimension_numbers=("NCH", "OIH", "NCH")) + b1[None, :, None]
    y = jnp.maximum(y, 0.0)
    y = lax.reduce_window(y, -jnp.inf, lax.max, (1, 1, 2), (1, 1, 2), "VALID")
    y = lax.conv_general_dilated(y, w2, window_strides=(1,), padding=[(2, 2)],
                                 dimension_numbers=("NCH", "OIH", "NCH")) + b2[None, :, None]
    y = jnp.maximum(y, 0.0)
    y = lax.reduce_window(y, -jnp.inf, lax.max, (1, 1, 2), (1, 1, 2), "VALID")
    y = y.reshape(y.shape[0], -1)                                  # PyTorch .view(-1, fc_in)
    y = jnp.maximum(y @ wf1.T + bf1, 0.0)
    return y @ wf2.T + bf2


# ---------------------------------------------------------------------------
# Deterministic parameter init (PyTorch-layout shapes, synthetic values)
# ---------------------------------------------------------------------------

def init_params(key, input_size, hidden_size, num_classes):
    fc_in = (input_size // 8) * 64
    ks = jax.random.split(key, 8)

    def u(k, shape, fan_in):
        bound = 1.0 / jnp.sqrt(jnp.float32(fan_in))
        return jax.random.uniform(k, shape, jnp.float32, -bound, bound)

    w1 = u(ks[0], (32, 1, 5), 1 * 5)
    b1 = u(ks[1], (32,), 1 * 5)
    w2 = u(ks[2], (64, 32, 5), 32 * 5)
    b2 = u(ks[3], (64,), 32 * 5)
    wf1 = u(ks[4], (hidden_size, fc_in), fc_in)
    bf1 = u(ks[5], (hidden_size,), fc_in)
    wf2 = u(ks[6], (num_classes, hidden_size), hidden_size)
    bf2 = u(ks[7], (num_classes,), hidden_size)
    return (w1, b1, w2, b2, wf1, bf1, wf2, bf2)


if __name__ == "__main__":
    B, INPUT_SIZE, HIDDEN, NUM_CLASSES = 8, 64, 32, 10

    key = jax.random.PRNGKey(0)
    k_x, k_p = jax.random.split(key)
    x = jax.random.normal(k_x, (B, INPUT_SIZE), jnp.float32)
    params = init_params(k_p, INPUT_SIZE, HIDDEN, NUM_CLASSES)

    fwd = jax.jit(fingerprint_forward)
    out = jax.block_until_ready(fwd(x, params))
    ref = jax.block_until_ready(reference_forward(x, params))

    assert out.shape == (B, NUM_CLASSES), out.shape
    assert jnp.allclose(out, ref, rtol=1e-3, atol=1e-3), (
        f"mismatch: max abs err {jnp.max(jnp.abs(out - ref))}")

    print("KERNEL_OK")
</pallas_src>

<mosaic_0001>
module attributes {stable_mosaic.version = 11 : i64} {
  func.func @kernel(%arg0: i32, %arg1: memref<64x16xf32, #tpu.memory_space<vmem>>, %arg2: memref<16x128xf32, #tpu.memory_space<vmem>>, %arg3: memref<1x64xf32, #tpu.memory_space<vmem>>, %arg4: memref<192x128xf32, #tpu.memory_space<vmem>>, %arg5: memref<1x64xf32, #tpu.memory_space<vmem>>, %arg6: memref<512x32xf32, #tpu.memory_space<vmem>>, %arg7: memref<1x32xf32, #tpu.memory_space<vmem>>, %arg8: memref<32x128xf32, #tpu.memory_space<vmem>>, %arg9: memref<1x128xf32, #tpu.memory_space<vmem>>, %arg10: memref<8x128xf32, #tpu.memory_space<vmem>>) attributes {dimension_semantics = [#tpu.dimension_semantics<parallel>], iteration_bounds = array<i64: 1>, scalar_prefetch = 0 : i64, scratch_operands = 0 : i64, tpu.core_type = #tpu.core_type<tc>, window_params = [{transform_indices = @transform_0, window_bounds = array<i64: 64, 16>}, {pipeline_mode = #tpu.pipeline_mode<synchronous>, transform_indices = @transform_1, window_bounds = array<i64: 16, 128>}, {pipeline_mode = #tpu.pipeline_mode<synchronous>, transform_indices = @transform_2, window_bounds = array<i64: 1, 64>}, {pipeline_mode = #tpu.pipeline_mode<synchronous>, transform_indices = @transform_3, window_bounds = array<i64: 192, 128>}, {pipeline_mode = #tpu.pipeline_mode<synchronous>, transform_indices = @transform_4, window_bounds = array<i64: 1, 64>}, {pipeline_mode = #tpu.pipeline_mode<synchronous>, transform_indices = @transform_5, window_bounds = array<i64: 512, 32>}, {pipeline_mode = #tpu.pipeline_mode<synchronous>, transform_indices = @transform_6, window_bounds = array<i64: 1, 32>}, {pipeline_mode = #tpu.pipeline_mode<synchronous>, transform_indices = @transform_7, window_bounds = array<i64: 32, 128>}, {pipeline_mode = #tpu.pipeline_mode<synchronous>, transform_indices = @transform_8, window_bounds = array<i64: 1, 128>}, {transform_indices = @transform_9, window_bounds = array<i64: 8, 128>}]} {
    %c0 = arith.constant 0 : index
    %c0_0 = arith.constant 0 : index
    %0 = vector.load %arg1[%c0, %c0_0] : memref<64x16xf32, #tpu.memory_space<vmem>>, vector<64x16xf32>
    %c0_1 = arith.constant 0 : index
    %c0_2 = arith.constant 0 : index
    %1 = vector.load %arg2[%c0_1, %c0_2] : memref<16x128xf32, #tpu.memory_space<vmem>>, vector<16x128xf32>
    %cst = arith.constant dense<0.000000e+00> : vector<64x128xf32>
    %2 = tpu.matmul %0, %1, %cst {dimension_numbers = #tpu.dot_dimension_numbers<[1], [0], [0], [1], [0, 0, 1, 1], [], []>} : vector<64x16xf32>, vector<16x128xf32>, vector<64x128xf32> -> vector<64x128xf32>
    %3 = vector.extract_strided_slice %2 {offsets = [0, 0], sizes = [64, 64], strides = [1, 1]} : vector<64x128xf32> to vector<64x64xf32>
    %4 = vector.extract_strided_slice %2 {offsets = [0, 64], sizes = [64, 64], strides = [1, 1]} : vector<64x128xf32> to vector<64x64xf32>
    %5 = arith.maximumf %3, %4 : vector<64x64xf32>
    %c0_3 = arith.constant 0 : index
    %c0_4 = arith.constant 0 : index
    %6 = vector.load %arg3[%c0_3, %c0_4] : memref<1x64xf32, #tpu.memory_space<vmem>>, vector<1x64xf32>
    %7 = vector.broadcast %6 : vector<1x64xf32> to vector<64x64xf32>
    %8 = arith.addf %5, %7 : vector<64x64xf32>
    %cst_5 = arith.constant 0.000000e+00 : f32
    %9 = vector.broadcast %cst_5 : f32 to vector<64x64xf32>
    %10 = arith.maximumf %8, %9 : vector<64x64xf32>
    %cst_6 = arith.constant 0.000000e+00 : f32
    %11 = vector.broadcast %cst_6 : f32 to vector<8x64xf32>
    %12 = vector.extract_strided_slice %10 {offsets = [0, 0], sizes = [56, 64], strides = [1, 1]} : vector<64x64xf32> to vector<56x64xf32>
    %13 = tpu.concatenate %11, %12 in 0 : vector<8x64xf32>, vector<56x64xf32> -> vector<64x64xf32>
    %14 = vector.extract_strided_slice %10 {offsets = [8, 0], sizes = [56, 64], strides = [1, 1]} : vector<64x64xf32> to vector<56x64xf32>
    %15 = tpu.concatenate %14, %11 in 0 : vector<56x64xf32>, vector<8x64xf32> -> vector<64x64xf32>
    %16 = tpu.concatenate %13, %10, %15 in 1 : vector<64x64xf32>, vector<64x64xf32>, vector<64x64xf32> -> vector<64x192xf32>
    %c0_7 = arith.constant 0 : index
    %c0_8 = arith.constant 0 : index
    %17 = vector.load %arg4[%c0_7, %c0_8] : memref<192x128xf32, #tpu.memory_space<vmem>>, vector<192x128xf32>
    %cst_9 = arith.constant dense<0.000000e+00> : vector<64x128xf32>
    %18 = tpu.matmul %16, %17, %cst_9 {dimension_numbers = #tpu.dot_dimension_numbers<[1], [0], [0], [1], [0, 0, 1, 1], [], []>} : vector<64x192xf32>, vector<192x128xf32>, vector<64x128xf32> -> vector<64x128xf32>
    %19 = vector.extract_strided_slice %18 {offsets = [0, 0], sizes = [64, 64], strides = [1, 1]} : vector<64x128xf32> to vector<64x64xf32>
    %20 = vector.extract_strided_slice %18 {offsets = [0, 64], sizes = [64, 64], strides = [1, 1]} : vector<64x128xf32> to vector<64x64xf32>
    %21 = arith.maximumf %19, %20 : vector<64x64xf32>
    %c0_10 = arith.constant 0 : index
    %c0_11 = arith.constant 0 : index
    %22 = vector.load %arg5[%c0_10, %c0_11] : memref<1x64xf32, #tpu.memory_space<vmem>>, vector<1x64xf32>
    %23 = vector.broadcast %22 : vector<1x64xf32> to vector<64x64xf32>
    %24 = arith.addf %21, %23 : vector<64x64xf32>
    %cst_12 = arith.constant 0.000000e+00 : f32
    %25 = vector.broadcast %cst_12 : f32 to vector<64x64xf32>
    %26 = arith.maximumf %24, %25 : vector<64x64xf32>
    %27 = vector.extract_strided_slice %26 {offsets = [0, 0], sizes = [8, 64], strides = [1, 1]} : vector<64x64xf32> to vector<8x64xf32>
    %28 = vector.extract_strided_slice %26 {offsets = [8, 0], sizes = [8, 64], strides = [1, 1]} : vector<64x64xf32> to vector<8x64xf32>
    %29 = vector.extract_strided_slice %26 {offsets = [16, 0], sizes = [8, 64], strides = [1, 1]} : vector<64x64xf32> to vector<8x64xf32>
    %30 = vector.extract_strided_slice %26 {offsets = [24, 0], sizes = [8, 64], strides = [1, 1]} : vector<64x64xf32> to vector<8x64xf32>
    %31 = vector.extract_strided_slice %26 {offsets = [32, 0], sizes = [8, 64], strides = [1, 1]} : vector<64x64xf32> to vector<8x64xf32>
    %32 = vector.extract_strided_slice %26 {offsets = [40, 0], sizes = [8, 64], strides = [1, 1]} : vector<64x64xf32> to vector<8x64xf32>
    %33 = vector.extract_strided_slice %26 {offsets = [48, 0], sizes = [8, 64], strides = [1, 1]} : vector<64x64xf32> to vector<8x64xf32>
    %34 = vector.extract_strided_slice %26 {offsets = [56, 0], sizes = [8, 64], strides = [1, 1]} : vector<64x64xf32> to vector<8x64xf32>
    %35 = tpu.concatenate %27, %28, %29, %30, %31, %32, %33, %34 in 1 : vector<8x64xf32>, vector<8x64xf32>, vector<8x64xf32>, vector<8x64xf32>, vector<8x64xf32>, vector<8x64xf32>, vector<8x64xf32>, vector<8x64xf32> -> vector<8x512xf32>
    %c0_13 = arith.constant 0 : index
    %c0_14 = arith.constant 0 : index
    %36 = vector.load %arg6[%c0_13, %c0_14] : memref<512x32xf32, #tpu.memory_space<vmem>>, vector<512x32xf32>
    %cst_15 = arith.constant dense<0.000000e+00> : vector<8x32xf32>
    %37 = tpu.matmul %35, %36, %cst_15 {dimension_numbers = #tpu.dot_dimension_numbers<[1], [0], [0], [1], [0, 0, 1, 1], [], []>} : vector<8x512xf32>, vector<512x32xf32>, vector<8x32xf32> -> vector<8x32xf32>
    %c0_16 = arith.constant 0 : index
    %c0_17 = arith.constant 0 : index
    %38 = vector.load %arg7[%c0_16, %c0_17] : memref<1x32xf32, #tpu.memory_space<vmem>>, vector<1x32xf32>
    %39 = vector.broadcast %38 : vector<1x32xf32> to vector<8x32xf32>
    %40 = arith.addf %37, %39 : vector<8x32xf32>
    %cst_18 = arith.constant 0.000000e+00 : f32
    %41 = vector.broadcast %cst_18 : f32 to vector<8x32xf32>
    %42 = arith.maximumf %40, %41 : vector<8x32xf32>
    %c0_19 = arith.constant 0 : index
    %c0_20 = arith.constant 0 : index
    %43 = vector.load %arg8[%c0_19, %c0_20] : memref<32x128xf32, #tpu.memory_space<vmem>>, vector<32x128xf32>
    %cst_21 = arith.constant dense<0.000000e+00> : vector<8x128xf32>
    %44 = tpu.matmul %42, %43, %cst_21 {dimension_numbers = #tpu.dot_dimension_numbers<[1], [0], [0], [1], [0, 0, 1, 1], [], []>} : vector<8x32xf32>, vector<32x128xf32>, vector<8x128xf32> -> vector<8x128xf32>
    %c0_22 = arith.constant 0 : index
    %c0_23 = arith.constant 0 : index
    %45 = vector.load %arg9[%c0_22, %c0_23] : memref<1x128xf32, #tpu.memory_space<vmem>>, vector<1x128xf32>
    %46 = vector.broadcast %45 : vector<1x128xf32> to vector<8x128xf32>
    %47 = arith.addf %44, %46 : vector<8x128xf32>
    %c0_24 = arith.constant 0 : index
    %c0_25 = arith.constant 0 : index
    %48 = vector.load %arg10[%c0_24, %c0_25] : memref<8x128xf32, #tpu.memory_space<vmem>>, vector<8x128xf32>
    tpu.vector_store %arg10[%c0_24, %c0_25], %47 {strides = array<i32>} : memref<8x128xf32, #tpu.memory_space<vmem>>, vector<8x128xf32>,
    return
  }
  func.func @transform_0(%arg0: i32) -> (i32, i32) {
    %c0_i32 = arith.constant 0 : i32
    %c0_i32_0 = arith.constant 0 : i32
    return %arg0, %c0_i32 : i32, i32
  }
  func.func @transform_1(%arg0: i32) -> (i32, i32) {
    %c0_i32 = arith.constant 0 : i32
    %c0_i32_0 = arith.constant 0 : i32
    %c0_i32_1 = arith.constant 0 : i32
    return %c0_i32, %c0_i32_0 : i32, i32
  }
  func.func @transform_2(%arg0: i32) -> (i32, i32) {
    %c0_i32 = arith.constant 0 : i32
    %c0_i32_0 = arith.constant 0 : i32
    %c0_i32_1 = arith.constant 0 : i32
    return %c0_i32, %c0_i32_0 : i32, i32
  }
  func.func @transform_3(%arg0: i32) -> (i32, i32) {
    %c0_i32 = arith.constant 0 : i32
    %c0_i32_0 = arith.constant 0 : i32
    %c0_i32_1 = arith.constant 0 : i32
    return %c0_i32, %c0_i32_0 : i32, i32
  }
  func.func @transform_4(%arg0: i32) -> (i32, i32) {
    %c0_i32 = arith.constant 0 : i32
    %c0_i32_0 = arith.constant 0 : i32
    %c0_i32_1 = arith.constant 0 : i32
    return %c0_i32, %c0_i32_0 : i32, i32
  }
  func.func @transform_5(%arg0: i32) -> (i32, i32) {
    %c0_i32 = arith.constant 0 : i32
    %c0_i32_0 = arith.constant 0 : i32
    %c0_i32_1 = arith.constant 0 : i32
    return %c0_i32, %c0_i32_0 : i32, i32
  }
  func.func @transform_6(%arg0: i32) -> (i32, i32) {
    %c0_i32 = arith.constant 0 : i32
    %c0_i32_0 = arith.constant 0 : i32
    %c0_i32_1 = arith.constant 0 : i32
    return %c0_i32, %c0_i32_0 : i32, i32
  }
  func.func @transform_7(%arg0: i32) -> (i32, i32) {
    %c0_i32 = arith.constant 0 : i32
    %c0_i32_0 = arith.constant 0 : i32
    %c0_i32_1 = arith.constant 0 : i32
    return %c0_i32, %c0_i32_0 : i32, i32
  }
  func.func @transform_8(%arg0: i32) -> (i32, i32) {
    %c0_i32 = arith.constant 0 : i32
    %c0_i32_0 = arith.constant 0 : i32
    %c0_i32_1 = arith.constant 0 : i32
    return %c0_i32, %c0_i32_0 : i32, i32
  }
  func.func @transform_9(%arg0: i32) -> (i32, i32) {
    %c0_i32 = arith.constant 0 : i32
    %c0_i32_0 = arith.constant 0 : i32
    return %arg0, %c0_i32 : i32, i32
  }
}

</mosaic_0001>

<llo_original>
// kernel: fingerprint_forward.1
$region0: #{fingerprint_forward.1}
  #allocation0 [shape = 'u32[]', space=smem, size = 0x4, offset = 0x4, fixed_abs, tag = 'smem constant byte address 0x4 - core index']
  #allocation1 [shape = 'u32[144,128]{1,0:T(1,128)}', space=vmem, size = 0x12000, scoped, tag = 'internal scratch']
  %s0 = inlined_call_operand.vmem [shape: f32[64,16], index: 0, kind: input, shape index: {}]
  %s1 = inlined_call_operand.vmem [shape: f32[16,128], index: 1, kind: input, shape index: {}]
  %s2 = inlined_call_operand.vmem [shape: f32[1,64], index: 2, kind: input, shape index: {}]
  %s3 = inlined_call_operand.vmem [shape: f32[192,128], index: 3, kind: input, shape index: {}]
  %s4 = inlined_call_operand.vmem [shape: f32[1,64], index: 4, kind: input, shape index: {}]
  %s5 = inlined_call_operand.vmem [shape: f32[512,32], index: 5, kind: input, shape index: {}]
  %s6 = inlined_call_operand.vmem [shape: f32[1,32], index: 6, kind: input, shape index: {}]
  %s7 = inlined_call_operand.vmem [shape: f32[32,128], index: 7, kind: input, shape index: {}]
  %s8 = inlined_call_operand.vmem [shape: f32[1,128], index: 8, kind: input, shape index: {}]
  %s9 = inlined_call_operand.hbm [shape: f32[8,128], index: 9, kind: output, shape index: {}]
  %s10 = sld [smem:[#allocation0]]
  $region46: #{fingerprint_forward.1} parent=0
    _
  %s12 = ssub.s32 1, %s10
  %s13 = scalar_select 0, %s12, %s10
  $region1: #{fingerprint_forward.1} parent=0
    #allocation2 [shape = 'u8[4096]{0}', space=vmem, size = 0x1000, scoped, tag = 'output window, operand 0, single buffered']
    #allocation3 [shape = 's32[1]{0}', space=sflag, size = 0x4, scoped, tag = 'scoped memory for fingerprint_forward.1']
    %14 = vsyncpa [#allocation3], 0
    // Predicated region
    $region2: #{fingerprint_forward.1} parent=1 // pred_check
      _
    $region3: #{fingerprint_forward.1} parent=1 // pred_check_branch
      %16 = sbr.rel (0) target = $region5
    $region4: #{fingerprint_forward.1} parent=1 // pred_region
      _
    $region5: #{fingerprint_forward.1} parent=1 // pred_fallthru
      _
    // Predicated region
    $region6: #{fingerprint_forward.1} parent=1 // pred_check
      _
    $region7: #{fingerprint_forward.1} parent=1 // pred_check_branch
      %18 = sbr.rel (0) target = $region9
    $region8: #{fingerprint_forward.1} parent=1 // pred_region
      _
    $region9: #{fingerprint_forward.1} parent=1 // pred_fallthru
      _
    // Predicated region
    $region10: #{fingerprint_forward.1} parent=1 // pred_check
      _
    $region11: #{fingerprint_forward.1} parent=1 // pred_check_branch
      %20 = sbr.rel (0) target = $region13
    $region12: #{fingerprint_forward.1} parent=1 // pred_region
      _
    $region13: #{fingerprint_forward.1} parent=1 // pred_fallthru
      _
    // Predicated region
    $region14: #{fingerprint_forward.1} parent=1 // pred_check
      _
    $region15: #{fingerprint_forward.1} parent=1 // pred_check_branch
      %22 = sbr.rel (0) target = $region17
    $region16: #{fingerprint_forward.1} parent=1 // pred_region
      _
    $region17: #{fingerprint_forward.1} parent=1 // pred_fallthru
      _
    // Predicated region
    $region18: #{fingerprint_forward.1} parent=1 // pred_check
      _
    $region19: #{fingerprint_forward.1} parent=1 // pred_check_branch
      %24 = sbr.rel (0) target = $region21
    $region20: #{fingerprint_forward.1} parent=1 // pred_region
      _
    $region21: #{fingerprint_forward.1} parent=1 // pred_fallthru
      _
    // Predicated region
    $region22: #{fingerprint_forward.1} parent=1 // pred_check
      _
    $region23: #{fingerprint_forward.1} parent=1 // pred_check_branch
      %26 = sbr.rel (0) target = $region25
    $region24: #{fingerprint_forward.1} parent=1 // pred_region
      _
    $region25: #{fingerprint_forward.1} parent=1 // pred_fallthru
      _
    // Predicated region
    $region26: #{fingerprint_forward.1} parent=1 // pred_check
      _
    $region27: #{fingerprint_forward.1} parent=1 // pred_check_branch
      %28 = sbr.rel (0) target = $region29
    $region28: #{fingerprint_forward.1} parent=1 // pred_region
      _
    $region29: #{fingerprint_forward.1} parent=1 // pred_fallthru
      _
    // Predicated region
    $region30: #{fingerprint_forward.1} parent=1 // pred_check
      _
    $region31: #{fingerprint_forward.1} parent=1 // pred_check_branch
      %30 = sbr.rel (0) target = $region33
    $region32: #{fingerprint_forward.1} parent=1 // pred_region
      _
    $region33: #{fingerprint_forward.1} parent=1 // pred_fallthru
      _
    // Predicated region
    $region34: #{fingerprint_forward.1} parent=1 // pred_check
      _
    $region35: #{fingerprint_forward.1} parent=1 // pred_check_branch
      %32 = sbr.rel (0) target = $region37
    $region36: #{fingerprint_forward.1} parent=1 // pred_region
      _
    $region37: #{fingerprint_forward.1} parent=1 // pred_fallthru
      _
    %v33 = vld [vmem:[%s0] sm:$0xff]
    %v34 = vld [vmem:[%s0 + $0x8] sm:$0xff]
    %v35 = vld [vmem:[%s0 + $0x10] sm:$0xff]
    %v36 = vld [vmem:[%s0 + $0x18] sm:$0xff]
    %v37 = vld [vmem:[%s0 + $0x20] sm:$0xff]
    %v38 = vld [vmem:[%s0 + $0x28] sm:$0xff]
    %v39 = vld [vmem:[%s0 + $0x30] sm:$0xff]
    %v40 = vld [vmem:[%s0 + $0x38] sm:$0xff]
    %v41 = vld [vmem:[%s1] sm:$0xff]
    %v42 = vld [vmem:[%s1 + $0x8] sm:$0xff]
    %vm43 = vcmask 130048
    %v45 = vsel %vm43, %v33, 0
    %v48 = vsel %vm43, %v34, 0
    %v51 = vsel %vm43, %v35, 0
    %v54 = vsel %vm43, %v36, 0
    %v57 = vsel %vm43, %v37, 0
    %v60 = vsel %vm43, %v38, 0
    %v63 = vsel %vm43, %v39, 0
    %v66 = vsel %vm43, %v40, 0
    %68 = vmatprep.subr.mxu0 0.0
    %69 = vmatpush1.msra.mxu0 0.0
    %70 = vmatprep.subr.mxu0 0.0
    %71 = vmatpush1.msra.mxu0 0.0
    %72 = vmatprep.subr.mxu0 0.0
    %73 = vmatpush1.msra.mxu0 0.0
    %74 = vmatprep.subr.mxu0 0.0
    %75 = vmatpush1.msra.mxu0 0.0
    %76 = vmatprep.subr.mxu0 0.0
    %77 = vmatpush1.msra.mxu0 0.0
    %78 = vmatprep.subr.mxu0 0.0
    %79 = vmatpush1.msra.mxu0 0.0
    %80 = vmatprep.subr.mxu0 0.0
    %81 = vmatpush1.msra.mxu0 0.0
    %82 = vmatprep.subr.mxu0 0.0
    %83 = vmatpush1.msra.mxu0 0.0
    %84 = vmatprep.subr.mxu0 0.0
    %85 = vmatpush1.msra.mxu0 0.0
    %86 = vmatprep.subr.mxu0 0.0
    %87 = vmatpush1.msra.mxu0 0.0
    %88 = vmatprep.subr.mxu0 0.0
    %89 = vmatpush1.msra.mxu0 0.0
    %90 = vmatprep.subr.mxu0 0.0
    %91 = vmatpush1.msra.mxu0 0.0
    %92 = vmatprep.subr.mxu0 0.0
    %93 = vmatpush1.msra.mxu0 0.0
    %94 = vmatprep.subr.mxu0 0.0
    %95 = vmatpush1.msra.mxu0 0.0
    %96 = vmatprep.subr.mxu0 0.0
    %97 = vmatpush1.msra.mxu0 %v42
    %98 = vmatprep.subr.mxu0 0.0
    %99 = vmatpush1.msra.mxu0 %v41
    %100 = vmatprep.subr.mxu0 0.0
    %101 = vmatpush2.msra.mxu0 0.0
    %102 = vmatprep.subr.mxu0 0.0
    %103 = vmatpush2.msra.mxu0 0.0
    %104 = vmatprep.subr.mxu0 0.0
    %105 = vmatpush2.msra.mxu0 0.0
    %106 = vmatprep.subr.mxu0 0.0
    %107 = vmatpush2.msra.mxu0 0.0
    %108 = vmatprep.subr.mxu0 0.0
    %109 = vmatpush2.msra.mxu0 0.0
    %110 = vmatprep.subr.mxu0 0.0
    %111 = vmatpush2.msra.mxu0 0.0
    %112 = vmatprep.subr.mxu0 0.0
    %113 = vmatpush2.msra.mxu0 0.0
    %114 = vmatprep.subr.mxu0 0.0
    %115 = vmatpush2.msra.mxu0 0.0
    %116 = vmatprep.subr.mxu0 0.0
    %117 = vmatpush2.msra.mxu0 0.0
    %118 = vmatprep.subr.mxu0 0.0
    %119 = vmatpush2.msra.mxu0 0.0
    %120 = vmatprep.subr.mxu0 0.0
    %121 = vmatpush2.msra.mxu0 0.0
    %122 = vmatprep.subr.mxu0 0.0
    %123 = vmatpush2.msra.mxu0 0.0
    %124 = vmatprep.subr.mxu0 0.0
    %125 = vmatpush2.msra.mxu0 0.0
    %126 = vmatprep.subr.mxu0 0.0
    %127 = vmatpush2.msra.mxu0 0.0
    %128 = vmatprep.subr.mxu0 0.0
    %129 = vmatpush2.msra.mxu0 0.0
    %130 = vmatprep.subr.mxu0 0.0
    %131 = vmatpush2.msra.mxu0 0.0
    %132 = vmatprep.mubr.f32.mxu0 0.0
    %133 = vmatmul.mubr.f32.gmra.mxu0 %v45
    %v134 = vpop.f32.mrf.mxu0
    %v135 = vadd.f32 0.0, %v134
    %v136 = vpop.f32.mrf.mxu0
    %137 = vmatprep.mubr.f32.mxu0 0.0
    %138 = vmatmul.mubr.f32.gmra.mxu0 %v48
    %v139 = vpop.f32.mrf.mxu0
    %v140 = vadd.f32 0.0, %v139
    %v141 = vpop.f32.mrf.mxu0
    %142 = vmatprep.mubr.f32.mxu0 0.0
    %143 = vmatmul.mubr.f32.gmra.mxu0 %v51
    %v144 = vpop.f32.mrf.mxu0
    %v145 = vadd.f32 0.0, %v144
    %v146 = vpop.f32.mrf.mxu0
    %147 = vmatprep.mubr.f32.mxu0 0.0
    %148 = vmatmul.mubr.f32.gmra.mxu0 %v54
    %v149 = vpop.f32.mrf.mxu0
    %v150 = vadd.f32 0.0, %v149
    %v151 = vpop.f32.mrf.mxu0
    %152 = vmatprep.mubr.f32.mxu0 0.0
    %153 = vmatmul.mubr.f32.gmra.mxu0 %v57
    %v154 = vpop.f32.mrf.mxu0
    %v155 = vadd.f32 0.0, %v154
    %v156 = vpop.f32.mrf.mxu0
    %157 = vmatprep.mubr.f32.mxu0 0.0
    %158 = vmatmul.mubr.f32.gmra.mxu0 %v60
    %v159 = vpop.f32.mrf.mxu0
    %v160 = vadd.f32 0.0, %v159
    %v161 = vpop.f32.mrf.mxu0
    %162 = vmatprep.mubr.f32.mxu0 0.0
    %163 = vmatmul.mubr.f32.gmra.mxu0 %v63
    %v164 = vpop.f32.mrf.mxu0
    %v165 = vadd.f32 0.0, %v164
    %v166 = vpop.f32.mrf.mxu0
    %167 = vmatprep.mubr.f32.mxu0 0.0
    %168 = vmatmul.mubr.f32.gmra.mxu0 %v66
    %v169 = vpop.f32.mrf.mxu0
    %v170 = vadd.f32 0.0, %v169
    %v171 = vpop.f32.mrf.mxu0
    %172 = vdwg.mxu0
    %181 = vrot.lane.b32.xlu0 %v135, 64
    %v182 = vpop.permute.xlu0 %181
    %183 = vrot.lane.b32.xlu0 %v140, 64
    %v184 = vpop.permute.xlu0 %183
    %185 = vrot.lane.b32.xlu0 %v145, 64
    %v186 = vpop.permute.xlu0 %185
    %187 = vrot.lane.b32.xlu0 %v150, 64
    %v188 = vpop.permute.xlu0 %187
    %189 = vrot.lane.b32.xlu0 %v155, 64
    %v190 = vpop.permute.xlu0 %189
    %191 = vrot.lane.b32.xlu0 %v160, 64
    %v192 = vpop.permute.xlu0 %191
    %193 = vrot.lane.b32.xlu0 %v165, 64
    %v194 = vpop.permute.xlu0 %193
    %195 = vrot.lane.b32.xlu0 %v170, 64
    %v196 = vpop.permute.xlu0 %195
    %v205 = vmax.f32 %v135, %v182
    %v206 = vmax.f32 %v140, %v184
    %v207 = vmax.f32 %v145, %v186
    %v208 = vmax.f32 %v150, %v188
    %v209 = vmax.f32 %v155, %v190
    %v210 = vmax.f32 %v160, %v192
    %v211 = vmax.f32 %v165, %v194
    %v212 = vmax.f32 %v170, %v196
    %v213 = vld [vmem:[%s2] sm:$0x1]
    %v215 = vlaneseq
    %v216 = vshrl.u32 %v215, 7
    %v217 = vsub.s32 0, %v216
    %v218 = vrot.slane %v213, %v217
    %v220 = vadd.f32 %v205, %v218
    %v221 = vadd.f32 %v206, %v218
    %v222 = vadd.f32 %v207, %v218
    %v223 = vadd.f32 %v208, %v218
    %v224 = vadd.f32 %v209, %v218
    %v225 = vadd.f32 %v210, %v218
    %v226 = vadd.f32 %v211, %v218
    %v227 = vadd.f32 %v212, %v218
    %v228 = vmax.f32 %v220, 0.0
    %v229 = vmax.f32 %v221, 0.0
    %v230 = vmax.f32 %v222, 0.0
    %v231 = vmax.f32 %v223, 0.0
    %v232 = vmax.f32 %v224, 0.0
    %v233 = vmax.f32 %v225, 0.0
    %v234 = vmax.f32 %v226, 0.0
    %v235 = vmax.f32 %v227, 0.0
    %244 = vrot.lane.b32.xlu0 %v228, 64
    %v245 = vpop.permute.xlu0 %244
    %246 = vrot.lane.b32.xlu0 %v229, 64
    %v247 = vpop.permute.xlu0 %246
    %248 = vrot.lane.b32.xlu0 %v230, 64
    %v249 = vpop.permute.xlu0 %248
    %250 = vrot.lane.b32.xlu0 %v231, 64
    %v251 = vpop.permute.xlu0 %250
    %252 = vrot.lane.b32.xlu0 %v232, 64
    %v253 = vpop.permute.xlu0 %252
    %254 = vrot.lane.b32.xlu0 %v233, 64
    %v255 = vpop.permute.xlu0 %254
    %256 = vrot.lane.b32.xlu0 %v234, 64
    %v257 = vpop.permute.xlu0 %256
    %258 = vrot.lane.b32.xlu0 %v235, 64
    %v259 = vpop.permute.xlu0 %258
    %vm268 = vcmask 523264
    %v269 = vsel %vm268, 0.0, %v245
    %v270 = vsel %vm268, %v228, %v247
    %v271 = vsel %vm268, %v229, %v249
    %v272 = vsel %vm268, %v230, %v251
    %v273 = vsel %vm268, %v231, %v253
    %v274 = vsel %vm268, %v232, %v255
    %v275 = vsel %vm268, %v233, %v257
    %v276 = vsel %vm268, %v234, %v259
    %v277 = vld [vmem:[%s3] sm:$0xff]
    %v278 = vld [vmem:[%s3 + $0x8] sm:$0xff]
    %v279 = vld [vmem:[%s3 + $0x10] sm:$0xff]
    %v280 = vld [vmem:[%s3 + $0x18] sm:$0xff]
    %v281 = vld [vmem:[%s3 + $0x20] sm:$0xff]
    %v282 = vld [vmem:[%s3 + $0x28] sm:$0xff]
    %v283 = vld [vmem:[%s3 + $0x30] sm:$0xff]
    %v284 = vld [vmem:[%s3 + $0x38] sm:$0xff]
    %v285 = vld [vmem:[%s3 + $0x40] sm:$0xff]
    %v286 = vld [vmem:[%s3 + $0x48] sm:$0xff]
    %v287 = vld [vmem:[%s3 + $0x50] sm:$0xff]
    %v288 = vld [vmem:[%s3 + $0x58] sm:$0xff]
    %v289 = vld [vmem:[%s3 + $0x60] sm:$0xff]
    %v290 = vld [vmem:[%s3 + $0x68] sm:$0xff]
    %v291 = vld [vmem:[%s3 + $0x70] sm:$0xff]
    %v292 = vld [vmem:[%s3 + $0x78] sm:$0xff]
    %v293 = vld [vmem:[%s3 + $0x80] sm:$0xff]
    %v294 = vld [vmem:[%s3 + $0x88] sm:$0xff]
    %v295 = vld [vmem:[%s3 + $0x90] sm:$0xff]
    %v296 = vld [vmem:[%s3 + $0x98] sm:$0xff]
    %v297 = vld [vmem:[%s3 + $0xa0] sm:$0xff]
    %v298 = vld [vmem:[%s3 + $0xa8] sm:$0xff]
    %v299 = vld [vmem:[%s3 + $0xb0] sm:$0xff]
    %v300 = vld [vmem:[%s3 + $0xb8] sm:$0xff]
    %v301 = vsel %vm268, %v229, 0
    %v303 = vsel %vm268, %v230, 0
    %v305 = vsel %vm268, %v231, 0
    %v307 = vsel %vm268, %v232, 0
    %v309 = vsel %vm268, %v233, 0
    %v311 = vsel %vm268, %v234, 0
    %v313 = vsel %vm268, %v235, 0
    %v316 = vsel %vm268, 0.0, 0
    %318 = vmatprep.subr.mxu0 0.0
    %319 = vmatpush1.msra.mxu0 %v292
    %320 = vmatprep.subr.mxu0 0.0
    %321 = vmatpush1.msra.mxu0 %v291
    %322 = vmatprep.subr.mxu0 0.0
    %323 = vmatpush1.msra.mxu0 %v290
    %324 = vmatprep.subr.mxu0 0.0
    %325 = vmatpush1.msra.mxu0 %v289
    %326 = vmatprep.subr.mxu0 0.0
    %327 = vmatpush1.msra.mxu0 %v288
    %328 = vmatprep.subr.mxu0 0.0
    %329 = vmatpush1.msra.mxu0 %v287
    %330 = vmatprep.subr.mxu0 0.0
    %331 = vmatpush1.msra.mxu0 %v286
    %332 = vmatprep.subr.mxu0 0.0
    %333 = vmatpush1.msra.mxu0 %v285
    %334 = vmatprep.subr.mxu0 0.0
    %335 = vmatpush1.msra.mxu0 %v284
    %336 = vmatprep.subr.mxu0 0.0
    %337 = vmatpush1.msra.mxu0 %v283
    %338 = vmatprep.subr.mxu0 0.0
    %339 = vmatpush1.msra.mxu0 %v282
    %340 = vmatprep.subr.mxu0 0.0
    %341 = vmatpush1.msra.mxu0 %v281
    %342 = vmatprep.subr.mxu0 0.0
    %343 = vmatpush1.msra.mxu0 %v280
    %344 = vmatprep.subr.mxu0 0.0
    %345 = vmatpush1.msra.mxu0 %v279
    %346 = vmatprep.subr.mxu0 0.0
    %347 = vmatpush1.msra.mxu0 %v278
    %348 = vmatprep.subr.mxu0 0.0
    %349 = vmatpush1.msra.mxu0 %v277
    %350 = vmatprep.subr.mxu0 0.0
    %351 = vmatpush2.msra.mxu0 0.0
    %352 = vmatprep.subr.mxu0 0.0
    %353 = vmatpush2.msra.mxu0 0.0
    %354 = vmatprep.subr.mxu0 0.0
    %355 = vmatpush2.msra.mxu0 0.0
    %356 = vmatprep.subr.mxu0 0.0
    %357 = vmatpush2.msra.mxu0 0.0
    %358 = vmatprep.subr.mxu0 0.0
    %359 = vmatpush2.msra.mxu0 0.0
    %360 = vmatprep.subr.mxu0 0.0
    %361 = vmatpush2.msra.mxu0 0.0
    %362 = vmatprep.subr.mxu0 0.0
    %363 = vmatpush2.msra.mxu0 0.0
    %364 = vmatprep.subr.mxu0 0.0
    %365 = vmatpush2.msra.mxu0 0.0
    %366 = vmatprep.subr.mxu0 0.0
    %367 = vmatpush2.msra.mxu0 %v300
    %368 = vmatprep.subr.mxu0 0.0
    %369 = vmatpush2.msra.mxu0 %v299
    %370 = vmatprep.subr.mxu0 0.0
    %371 = vmatpush2.msra.mxu0 %v298
    %372 = vmatprep.subr.mxu0 0.0
    %373 = vmatpush2.msra.mxu0 %v297
    %374 = vmatprep.subr.mxu0 0.0
    %375 = vmatpush2.msra.mxu0 %v296
    %376 = vmatprep.subr.mxu0 0.0
    %377 = vmatpush2.msra.mxu0 %v295
    %378 = vmatprep.subr.mxu0 0.0
    %379 = vmatpush2.msra.mxu0 %v294
    %380 = vmatprep.subr.mxu0 0.0
    %381 = vmatpush2.msra.mxu0 %v293
    %382 = vmatprep.mubr.f32.mxu0 %v301
    %383 = vmatmul.mubr.f32.gmra.mxu0 %v269
    %v384 = vpop.f32.mrf.mxu0
    %v385 = vadd.f32 0.0, %v384
    %v386 = vpop.f32.mrf.mxu0
    %387 = vmatprep.mubr.f32.mxu0 %v303
    %388 = vmatmul.mubr.f32.gmra.mxu0 %v270
    %v389 = vpop.f32.mrf.mxu0
    %v390 = vadd.f32 0.0, %v389
    %v391 = vpop.f32.mrf.mxu0
    %392 = vmatprep.mubr.f32.mxu0 %v305
    %393 = vmatmul.mubr.f32.gmra.mxu0 %v271
    %v394 = vpop.f32.mrf.mxu0
    %v395 = vadd.f32 0.0, %v394
    %v396 = vpop.f32.mrf.mxu0
    %397 = vmatprep.mubr.f32.mxu0 %v307
    %398 = vmatmul.mubr.f32.gmra.mxu0 %v272
    %v399 = vpop.f32.mrf.mxu0
    %v400 = vadd.f32 0.0, %v399
    %v401 = vpop.f32.mrf.mxu0
    %402 = vmatprep.mubr.f32.mxu0 %v309
    %403 = vmatmul.mubr.f32.gmra.mxu0 %v273
    %v404 = vpop.f32.mrf.mxu0
    %v405 = vadd.f32 0.0, %v404
    %v406 = vpop.f32.mrf.mxu0
    %407 = vmatprep.mubr.f32.mxu0 %v311
    %408 = vmatmul.mubr.f32.gmra.mxu0 %v274
    %v409 = vpop.f32.mrf.mxu0
    %v410 = vadd.f32 0.0, %v409
    %v411 = vpop.f32.mrf.mxu0
    %412 = vmatprep.mubr.f32.mxu0 %v313
    %413 = vmatmul.mubr.f32.gmra.mxu0 %v275
    %v414 = vpop.f32.mrf.mxu0
    %v415 = vadd.f32 0.0, %v414
    %v416 = vpop.f32.mrf.mxu0
    %417 = vmatprep.mubr.f32.mxu0 %v316
    %418 = vmatmul.mubr.f32.gmra.mxu0 %v276
    %v419 = vpop.f32.mrf.mxu0
    %v420 = vadd.f32 0.0, %v419
    %v421 = vpop.f32.mrf.mxu0
    %422 = vdwg.mxu0
    %431 = vrot.lane.b32.xlu0 %v385, 64
    %v432 = vpop.permute.xlu0 %431
    %433 = vrot.lane.b32.xlu0 %v390, 64
    %v434 = vpop.permute.xlu0 %433
    %435 = vrot.lane.b32.xlu0 %v395, 64
    %v436 = vpop.permute.xlu0 %435
    %437 = vrot.lane.b32.xlu0 %v400, 64
    %v438 = vpop.permute.xlu0 %437
    %439 = vrot.lane.b32.xlu0 %v405, 64
    %v440 = vpop.permute.xlu0 %439
    %441 = vrot.lane.b32.xlu0 %v410, 64
    %v442 = vpop.permute.xlu0 %441
    %443 = vrot.lane.b32.xlu0 %v415, 64
    %v444 = vpop.permute.xlu0 %443
    %445 = vrot.lane.b32.xlu0 %v420, 64
    %v446 = vpop.permute.xlu0 %445
    %v455 = vmax.f32 %v385, %v432
    %v456 = vmax.f32 %v390, %v434
    %v457 = vmax.f32 %v395, %v436
    %v458 = vmax.f32 %v400, %v438
    %v459 = vmax.f32 %v405, %v440
    %v460 = vmax.f32 %v410, %v442
    %v461 = vmax.f32 %v415, %v444
    %v462 = vmax.f32 %v420, %v446
    %v463 = vld [vmem:[%s4] sm:$0x1]
    %v465 = vlaneseq
    %v466 = vshrl.u32 %v465, 7
    %v467 = vsub.s32 0, %v466
    %v468 = vrot.slane %v463, %v467
    %v470 = vadd.f32 %v455, %v468
    %v471 = vadd.f32 %v456, %v468
    %v472 = vadd.f32 %v457, %v468
    %v473 = vadd.f32 %v458, %v468
    %v474 = vadd.f32 %v459, %v468
    %v475 = vadd.f32 %v460, %v468
    %v476 = vadd.f32 %v461, %v468
    %v477 = vadd.f32 %v462, %v468
    %v478 = vmax.f32 %v470, 0.0
    %v479 = vmax.f32 %v471, 0.0
    %v480 = vmax.f32 %v472, 0.0
    %v481 = vmax.f32 %v473, 0.0
    %v482 = vmax.f32 %v474, 0.0
    %v483 = vmax.f32 %v475, 0.0
    %v484 = vmax.f32 %v476, 0.0
    %v485 = vmax.f32 %v477, 0.0
    %487 = vrot.lane.b32.xlu0 %v479, 64
    %v488 = vpop.permute.xlu0 %487
    %491 = vrot.lane.b32.xlu0 %v481, 64
    %v492 = vpop.permute.xlu0 %491
    %495 = vrot.lane.b32.xlu0 %v483, 64
    %v496 = vpop.permute.xlu0 %495
    %499 = vrot.lane.b32.xlu0 %v485, 64
    %v500 = vpop.permute.xlu0 %499
    %v502 = vsel %vm268, %v478, %v488
    %v503 = vsel %vm268, %v480, %v492
    %v504 = vsel %vm268, %v482, %v496
    %v505 = vsel %vm268, %v484, %v500
    %v506 = vld [vmem:[%s5] sm:$0xff]
    %v507 = vld [vmem:[%s5 + $0x8] sm:$0xff]
    %v508 = vld [vmem:[%s5 + $0x10] sm:$0xff]
    %v509 = vld [vmem:[%s5 + $0x18] sm:$0xff]
    %v510 = vld [vmem:[%s5 + $0x20] sm:$0xff]
    %v511 = vld [vmem:[%s5 + $0x28] sm:$0xff]
    %v512 = vld [vmem:[%s5 + $0x30] sm:$0xff]
    %v513 = vld [vmem:[%s5 + $0x38] sm:$0xff]
    %v514 = vld [vmem:[%s5 + $0x40] sm:$0xff]
    %v515 = vld [vmem:[%s5 + $0x48] sm:$0xff]
    %v516 = vld [vmem:[%s5 + $0x50] sm:$0xff]
    %v517 = vld [vmem:[%s5 + $0x58] sm:$0xff]
    %v518 = vld [vmem:[%s5 + $0x60] sm:$0xff]
    %v519 = vld [vmem:[%s5 + $0x68] sm:$0xff]
    %v520 = vld [vmem:[%s5 + $0x70] sm:$0xff]
    %v521 = vld [vmem:[%s5 + $0x78] sm:$0xff]
    %v522 = vld [vmem:[%s5 + $0x80] sm:$0xff]
    %v523 = vld [vmem:[%s5 + $0x88] sm:$0xff]
    %v524 = vld [vmem:[%s5 + $0x90] sm:$0xff]
    %v525 = vld [vmem:[%s5 + $0x98] sm:$0xff]
    %v526 = vld [vmem:[%s5 + $0xa0] sm:$0xff]
    %v527 = vld [vmem:[%s5 + $0xa8] sm:$0xff]
    %v528 = vld [vmem:[%s5 + $0xb0] sm:$0xff]
    %v529 = vld [vmem:[%s5 + $0xb8] sm:$0xff]
    %v530 = vld [vmem:[%s5 + $0xc0] sm:$0xff]
    %v531 = vld [vmem:[%s5 + $0xc8] sm:$0xff]
    %v532 = vld [vmem:[%s5 + $0xd0] sm:$0xff]
    %v533 = vld [vmem:[%s5 + $0xd8] sm:$0xff]
    %v534 = vld [vmem:[%s5 + $0xe0] sm:$0xff]
    %v535 = vld [vmem:[%s5 + $0xe8] sm:$0xff]
    %v536 = vld [vmem:[%s5 + $0xf0] sm:$0xff]
    %v537 = vld [vmem:[%s5 + $0xf8] sm:$0xff]
    %v538 = vld [vmem:[%s5 + $0x100] sm:$0xff]
    %v539 = vld [vmem:[%s5 + $0x108] sm:$0xff]
    %v540 = vld [vmem:[%s5 + $0x110] sm:$0xff]
    %v541 = vld [vmem:[%s5 + $0x118] sm:$0xff]
    %v542 = vld [vmem:[%s5 + $0x120] sm:$0xff]
    %v543 = vld [vmem:[%s5 + $0x128] sm:$0xff]
    %v544 = vld [vmem:[%s5 + $0x130] sm:$0xff]
    %v545 = vld [vmem:[%s5 + $0x138] sm:$0xff]
    %v546 = vld [vmem:[%s5 + $0x140] sm:$0xff]
    %v547 = vld [vmem:[%s5 + $0x148] sm:$0xff]
    %v548 = vld [vmem:[%s5 + $0x150] sm:$0xff]
    %v549 = vld [vmem:[%s5 + $0x158] sm:$0xff]
    %v550 = vld [vmem:[%s5 + $0x160] sm:$0xff]
    %v551 = vld [vmem:[%s5 + $0x168] sm:$0xff]
    %v552 = vld [vmem:[%s5 + $0x170] sm:$0xff]
    %v553 = vld [vmem:[%s5 + $0x178] sm:$0xff]
    %v554 = vld [vmem:[%s5 + $0x180] sm:$0xff]
    %v555 = vld [vmem:[%s5 + $0x188] sm:$0xff]
    %v556 = vld [vmem:[%s5 + $0x190] sm:$0xff]
    %v557 = vld [vmem:[%s5 + $0x198] sm:$0xff]
    %v558 = vld [vmem:[%s5 + $0x1a0] sm:$0xff]
    %v559 = vld [vmem:[%s5 + $0x1a8] sm:$0xff]
    %v560 = vld [vmem:[%s5 + $0x1b0] sm:$0xff]
    %v561 = vld [vmem:[%s5 + $0x1b8] sm:$0xff]
    %v562 = vld [vmem:[%s5 + $0x1c0] sm:$0xff]
    %v563 = vld [vmem:[%s5 + $0x1c8] sm:$0xff]
    %v564 = vld [vmem:[%s5 + $0x1d0] sm:$0xff]
    %v565 = vld [vmem:[%s5 + $0x1d8] sm:$0xff]
    %v566 = vld [vmem:[%s5 + $0x1e0] sm:$0xff]
    %v567 = vld [vmem:[%s5 + $0x1e8] sm:$0xff]
    %v568 = vld [vmem:[%s5 + $0x1f0] sm:$0xff]
    %v569 = vld [vmem:[%s5 + $0x1f8] sm:$0xff]
    %v570 = vld [vmem:[%s6] sm:$0x1]
    %v572 = vlaneseq
    %v573 = vshrl.u32 %v572, 7
    %v574 = vsub.s32 0, %v573
    %v575 = vrot.slane %v570, %v574
    %577 = vmatprep.subr.mxu0 0.0
    %578 = vmatpush1.msra.mxu0 %v521
    %579 = vmatprep.subr.mxu0 0.0
    %580 = vmatpush1.msra.mxu0 %v520
    %581 = vmatprep.subr.mxu0 0.0
    %582 = vmatpush1.msra.mxu0 %v519
    %583 = vmatprep.subr.mxu0 0.0
    %584 = vmatpush1.msra.mxu0 %v518
    %585 = vmatprep.subr.mxu0 0.0
    %586 = vmatpush1.msra.mxu0 %v517
    %587 = vmatprep.subr.mxu0 0.0
    %588 = vmatpush1.msra.mxu0 %v516
    %589 = vmatprep.subr.mxu0 0.0
    %590 = vmatpush1.msra.mxu0 %v515
    %591 = vmatprep.subr.mxu0 0.0
    %592 = vmatpush1.msra.mxu0 %v514
    %593 = vmatprep.subr.mxu0 0.0
    %594 = vmatpush1.msra.mxu0 %v513
    %595 = vmatprep.subr.mxu0 0.0
    %596 = vmatpush1.msra.mxu0 %v512
    %597 = vmatprep.subr.mxu0 0.0
    %598 = vmatpush1.msra.mxu0 %v511
    %599 = vmatprep.subr.mxu0 0.0
    %600 = vmatpush1.msra.mxu0 %v510
    %601 = vmatprep.subr.mxu0 0.0
    %602 = vmatpush1.msra.mxu0 %v509
    %603 = vmatprep.subr.mxu0 0.0
    %604 = vmatpush1.msra.mxu0 %v508
    %605 = vmatprep.subr.mxu0 0.0
    %606 = vmatpush1.msra.mxu0 %v507
    %607 = vmatprep.subr.mxu0 0.0
    %608 = vmatpush1.msra.mxu0 %v506
    %609 = vmatprep.subr.mxu0 0.0
    %610 = vmatpush2.msra.mxu0 %v537
    %611 = vmatprep.subr.mxu0 0.0
    %612 = vmatpush2.msra.mxu0 %v536
    %613 = vmatprep.subr.mxu0 0.0
    %614 = vmatpush2.msra.mxu0 %v535
    %615 = vmatprep.subr.mxu0 0.0
    %616 = vmatpush2.msra.mxu0 %v534
    %617 = vmatprep.subr.mxu0 0.0
    %618 = vmatpush2.msra.mxu0 %v533
    %619 = vmatprep.subr.mxu0 0.0
    %620 = vmatpush2.msra.mxu0 %v532
    %621 = vmatprep.subr.mxu0 0.0
    %622 = vmatpush2.msra.mxu0 %v531
    %623 = vmatprep.subr.mxu0 0.0
    %624 = vmatpush2.msra.mxu0 %v530
    %625 = vmatprep.subr.mxu0 0.0
    %626 = vmatpush2.msra.mxu0 %v529
    %627 = vmatprep.subr.mxu0 0.0
    %628 = vmatpush2.msra.mxu0 %v528
    %629 = vmatprep.subr.mxu0 0.0
    %630 = vmatpush2.msra.mxu0 %v527
    %631 = vmatprep.subr.mxu0 0.0
    %632 = vmatpush2.msra.mxu0 %v526
    %633 = vmatprep.subr.mxu0 0.0
    %634 = vmatpush2.msra.mxu0 %v525
    %635 = vmatprep.subr.mxu0 0.0
    %636 = vmatpush2.msra.mxu0 %v524
    %637 = vmatprep.subr.mxu0 0.0
    %638 = vmatpush2.msra.mxu0 %v523
    %639 = vmatprep.subr.mxu0 0.0
    %640 = vmatpush2.msra.mxu0 %v522
    %641 = vmatprep.mubr.f32.mxu0 %v503
    %642 = vmatmul.mubr.f32.gmra.mxu0 %v502
    %v643 = vpop.f32.mrf.mxu0
    %v644 = vadd.f32 %v575, %v643
    %v645 = vpop.f32.mrf.mxu0
    %646 = vdwg.mxu0
    %647 = vmatprep.subr.mxu0 0.0
    %648 = vmatpush1.msra.mxu0 %v553
    %649 = vmatprep.subr.mxu0 0.0
    %650 = vmatpush1.msra.mxu0 %v552
    %651 = vmatprep.subr.mxu0 0.0
    %652 = vmatpush1.msra.mxu0 %v551
    %653 = vmatprep.subr.mxu0 0.0
    %654 = vmatpush1.msra.mxu0 %v550
    %655 = vmatprep.subr.mxu0 0.0
    %656 = vmatpush1.msra.mxu0 %v549
    %657 = vmatprep.subr.mxu0 0.0
    %658 = vmatpush1.msra.mxu0 %v548
    %659 = vmatprep.subr.mxu0 0.0
    %660 = vmatpush1.msra.mxu0 %v547
    %661 = vmatprep.subr.mxu0 0.0
    %662 = vmatpush1.msra.mxu0 %v546
    %663 = vmatprep.subr.mxu0 0.0
    %664 = vmatpush1.msra.mxu0 %v545
    %665 = vmatprep.subr.mxu0 0.0
    %666 = vmatpush1.msra.mxu0 %v544
    %667 = vmatprep.subr.mxu0 0.0
    %668 = vmatpush1.msra.mxu0 %v543
    %669 = vmatprep.subr.mxu0 0.0
    %670 = vmatpush1.msra.mxu0 %v542
    %671 = vmatprep.subr.mxu0 0.0
    %672 = vmatpush1.msra.mxu0 %v541
    %673 = vmatprep.subr.mxu0 0.0
    %674 = vmatpush1.msra.mxu0 %v540
    %675 = vmatprep.subr.mxu0 0.0
    %676 = vmatpush1.msra.mxu0 %v539
    %677 = vmatprep.subr.mxu0 0.0
    %678 = vmatpush1.msra.mxu0 %v538
    %679 = vmatprep.subr.mxu0 0.0
    %680 = vmatpush2.msra.mxu0 %v569
    %681 = vmatprep.subr.mxu0 0.0
    %682 = vmatpush2.msra.mxu0 %v568
    %683 = vmatprep.subr.mxu0 0.0
    %684 = vmatpush2.msra.mxu0 %v567
    %685 = vmatprep.subr.mxu0 0.0
    %686 = vmatpush2.msra.mxu0 %v566
    %687 = vmatprep.subr.mxu0 0.0
    %688 = vmatpush2.msra.mxu0 %v565
    %689 = vmatprep.subr.mxu0 0.0
    %690 = vmatpush2.msra.mxu0 %v564
    %691 = vmatprep.subr.mxu0 0.0
    %692 = vmatpush2.msra.mxu0 %v563
    %693 = vmatprep.subr.mxu0 0.0
    %694 = vmatpush2.msra.mxu0 %v562
    %695 = vmatprep.subr.mxu0 0.0
    %696 = vmatpush2.msra.mxu0 %v561
    %697 = vmatprep.subr.mxu0 0.0
    %698 = vmatpush2.msra.mxu0 %v560
    %699 = vmatprep.subr.mxu0 0.0
    %700 = vmatpush2.msra.mxu0 %v559
    %701 = vmatprep.subr.mxu0 0.0
    %702 = vmatpush2.msra.mxu0 %v558
    %703 = vmatprep.subr.mxu0 0.0
    %704 = vmatpush2.msra.mxu0 %v557
    %705 = vmatprep.subr.mxu0 0.0
    %706 = vmatpush2.msra.mxu0 %v556
    %707 = vmatprep.subr.mxu0 0.0
    %708 = vmatpush2.msra.mxu0 %v555
    %709 = vmatprep.subr.mxu0 0.0
    %710 = vmatpush2.msra.mxu0 %v554
    %711 = vmatprep.mubr.f32.mxu0 %v505
    %712 = vmatmul.mubr.f32.gmra.mxu0 %v504
    %v713 = vpop.f32.mrf.mxu0
    %v714 = vadd.f32 %v644, %v713
    %v715 = vpop.f32.mrf.mxu0
    %716 = vdwg.mxu0
    %v717 = vmax.f32 %v714, 0.0
    %v718 = vld [vmem:[%s7] sm:$0xff]
    %v719 = vld [vmem:[%s7 + $0x8] sm:$0xff]
    %v720 = vld [vmem:[%s7 + $0x10] sm:$0xff]
    %v721 = vld [vmem:[%s7 + $0x18] sm:$0xff]
    %v722 = vld [vmem:[%s8] sm:$0x1]
    %v724 = vlaneseq
    %v725 = vshrl.u32 %v724, 7
    %v726 = vsub.s32 0, %v725
    %v727 = vrot.slane %v722, %v726
    %vm729 = vcmask 261120
    %v731 = vsel %vm729, %v717, 0
    %733 = vmatprep.subr.mxu0 0.0
    %734 = vmatpush1.msra.mxu0 0.0
    %735 = vmatprep.subr.mxu0 0.0
    %736 = vmatpush1.msra.mxu0 0.0
    %737 = vmatprep.subr.mxu0 0.0
    %738 = vmatpush1.msra.mxu0 0.0
    %739 = vmatprep.subr.mxu0 0.0
    %740 = vmatpush1.msra.mxu0 0.0
    %741 = vmatprep.subr.mxu0 0.0
    %742 = vmatpush1.msra.mxu0 0.0
    %743 = vmatprep.subr.mxu0 0.0
    %744 = vmatpush1.msra.mxu0 0.0
    %745 = vmatprep.subr.mxu0 0.0
    %746 = vmatpush1.msra.mxu0 0.0
    %747 = vmatprep.subr.mxu0 0.0
    %748 = vmatpush1.msra.mxu0 0.0
    %749 = vmatprep.subr.mxu0 0.0
    %750 = vmatpush1.msra.mxu0 0.0
    %751 = vmatprep.subr.mxu0 0.0
    %752 = vmatpush1.msra.mxu0 0.0
    %753 = vmatprep.subr.mxu0 0.0
    %754 = vmatpush1.msra.mxu0 0.0
    %755 = vmatprep.subr.mxu0 0.0
    %756 = vmatpush1.msra.mxu0 0.0
    %757 = vmatprep.subr.mxu0 0.0
    %758 = vmatpush1.msra.mxu0 %v721
    %759 = vmatprep.subr.mxu0 0.0
    %760 = vmatpush1.msra.mxu0 %v720
    %761 = vmatprep.subr.mxu0 0.0
    %762 = vmatpush1.msra.mxu0 %v719
    %763 = vmatprep.subr.mxu0 0.0
    %764 = vmatpush1.msra.mxu0 %v718
    %765 = vmatprep.subr.mxu0 0.0
    %766 = vmatpush2.msra.mxu0 0.0
    %767 = vmatprep.subr.mxu0 0.0
    %768 = vmatpush2.msra.mxu0 0.0
    %769 = vmatprep.subr.mxu0 0.0
    %770 = vmatpush2.msra.mxu0 0.0
    %771 = vmatprep.subr.mxu0 0.0
    %772 = vmatpush2.msra.mxu0 0.0
    %773 = vmatprep.subr.mxu0 0.0
    %774 = vmatpush2.msra.mxu0 0.0
    %775 = vmatprep.subr.mxu0 0.0
    %776 = vmatpush2.msra.mxu0 0.0
    %777 = vmatprep.subr.mxu0 0.0
    %778 = vmatpush2.msra.mxu0 0.0
    %779 = vmatprep.subr.mxu0 0.0
    %780 = vmatpush2.msra.mxu0 0.0
    %781 = vmatprep.subr.mxu0 0.0
    %782 = vmatpush2.msra.mxu0 0.0
    %783 = vmatprep.subr.mxu0 0.0
    %784 = vmatpush2.msra.mxu0 0.0
    %785 = vmatprep.subr.mxu0 0.0
    %786 = vmatpush2.msra.mxu0 0.0
    %787 = vmatprep.subr.mxu0 0.0
    %788 = vmatpush2.msra.mxu0 0.0
    %789 = vmatprep.subr.mxu0 0.0
    %790 = vmatpush2.msra.mxu0 0.0
    %791 = vmatprep.subr.mxu0 0.0
    %792 = vmatpush2.msra.mxu0 0.0
    %793 = vmatprep.subr.mxu0 0.0
    %794 = vmatpush2.msra.mxu0 0.0
    %795 = vmatprep.subr.mxu0 0.0
    %796 = vmatpush2.msra.mxu0 0.0
    %797 = vmatprep.mubr.f32.mxu0 0.0
    %798 = vmatmul.mubr.f32.gmra.mxu0 %v731
    %v799 = vpop.f32.mrf.mxu0
    %v800 = vadd.f32 %v727, %v799
    %v801 = vpop.f32.mrf.mxu0
    %802 = vdwg.mxu0
    %803 = vst [vmem:[#allocation2] sm:$0xff] %v800
    // Predicated region
    $region38: #{fingerprint_forward.1} parent=1 // pred_check
      _
    $region39: #{fingerprint_forward.1} parent=1 // pred_check_branch
      %805 = sbr.rel (0) target = $region41
    $region40: #{fingerprint_forward.1} parent=1 // pred_region
      %s807 = ssub.s32 128, 128
      %808 = vsyncadd [#allocation3], %s807
      %s810 = sshll.u32 [#allocation2], 4
      %s811 = int_to_ptr.vmem [resolvable:$true] %s810
      %813 = dma.vmem_to_hbm [thread:$0]  %s811, 128, %s9, [#allocation3]
    $region41: #{fingerprint_forward.1} parent=1 // pred_fallthru
      _
    // Predicated region
    $region42: #{fingerprint_forward.1} parent=1 // pred_check
      _
    $region43: #{fingerprint_forward.1} parent=1 // pred_check_branch
      %815 = sbr.rel (0) target = $region45
    $region44: #{fingerprint_forward.1} parent=1 // pred_region
      %816 = dma.done [#allocation3], 128
    $region45: #{fingerprint_forward.1} parent=1 // pred_fallthru
      _
    %817 = vsyncpa [#allocation3], 1

</llo_original>
